<compile_context>
chip_gen: v7x
topology: tpu7x:2x2x1
jax: 0.10.0
libtpu: 0.0.40
codegen_flags: <defaults>
</compile_context>

<pallas_src>
import numpy as np
import jax
import jax.numpy as jnp
from jax.experimental import pallas as pl
from jax.experimental.pallas import tpu as pltpu


def _pe_add_kernel(pe_ref, x_ref, o_ref):
    # pe_ref: (s_blk, D) f32 ; x_ref / o_ref: (s_blk, B*D) in x.dtype
    reps = x_ref.shape[1] // pe_ref.shape[1]
    pe = pe_ref[...]
    if reps > 1:
        # Replicate across the batch along lanes so the output store is one
        # full-width (lane-dense) vst; cheap lane copies, no recomputed sin.
        pe = jnp.concatenate([pe] * reps, axis=-1)
    o_ref[...] = (x_ref[...].astype(jnp.float32) + pe).astype(o_ref.dtype)


def _pick_s_block(S, row_bytes, target_bytes=4 << 20, min_grid_steps=4):
    """Sequence rows per tile.

    Targets ~`target_bytes` per x tile (rows a multiple of 8, per the sublane
    rule), and caps the tile so there are at least `min_grid_steps` grid steps
    when S is large enough, letting the 1-D "parallel" grid axis split across
    both TensorCores on v7x. Ragged last blocks are fine (cdiv grid + masking).
    """
    rows = max(8, (target_bytes // max(row_bytes, 1)) // 8 * 8)
    if S >= 8 * min_grid_steps:
        cap = max(8, (((S + min_grid_steps - 1) // min_grid_steps) // 8) * 8)
        rows = min(rows, cap)
    if rows >= S:
        return S  # single full-extent block (allowed: block dim == array dim)
    return rows


def position_embedding_sine_bh(x, *, max_len=1024, s_block=None, batch_first=False):
    """pos[s] = x[s] + pe[s // 2] for x of shape (S, B, D) (batch_first=False)."""
    if batch_first:
        # TODO(synk): batch_first=True branch (pos = x + pe.permute(1,0,2)[:, :S, :]) not implemented.
        raise NotImplementedError("only batch_first=False is implemented")

    S, B, D = x.shape
    assert D % 2 == 0, "d_model must be even (same implicit assumption as PyTorch)"
    assert S % 2 == 0, "BH forward requires an even sequence length"
    assert S // 2 <= max_len, "sequence length exceeds max_len"

    # Trace-time PE buffer, identical to the PyTorch registered buffer.
    pe = np.zeros((max_len, D), dtype=np.float32)
    position = np.arange(0, max_len, dtype=np.float32)[:, None]
    div_term = np.exp(np.arange(0, D, 2, dtype=np.float32) * (-np.log(10000.0) / D))
    pe[:, 0::2] = np.sin(position * div_term)
    pe[:, 1::2] = np.cos(position * div_term)
    # Sequence position s uses row s // 2 (consecutive pairs share a PE row).
    pe_seq = jnp.asarray(pe[np.arange(S) // 2], dtype=jnp.float32)  # (S, D)

    BD = B * D
    itemsize = jnp.dtype(x.dtype).itemsize
    if s_block is None:
        s_block = _pick_s_block(S, BD * itemsize)
    assert s_block <= S
    assert s_block % 8 == 0 or s_block == S, "tile rows must be a multiple of 8 (or == S)"
    grid = (pl.cdiv(S, s_block),)

    # Note: lane-dense output (the biggest measured lever) needs B*D to be a
    # multiple of 128; typical d_model values satisfy this. Smaller shapes (like
    # the demo below) still run correctly, just with masked stores.
    x2 = x.reshape(S, BD)  # free view of contiguous (S, B, D)

    # Double-buffered footprint: 2x in-tile + 2x out-tile + 2x pe-tile (+ slack).
    tile_x_bytes = s_block * BD * itemsize
    tile_pe_bytes = s_block * D * 4
    vmem_limit = 4 * tile_x_bytes + 2 * tile_pe_bytes + (4 << 20)
    vmem_limit = int(min(max(vmem_limit, 32 << 20), 48 << 20))

    out = pl.pallas_call(
        _pe_add_kernel,
        out_shape=jax.ShapeDtypeStruct((S, BD), x.dtype),
        grid_spec=pltpu.PrefetchScalarGridSpec(
            num_scalar_prefetch=0,
            grid=grid,
            in_specs=[
                pl.BlockSpec((s_block, D), lambda i: (i, 0)),    # pe slab (f32)
                pl.BlockSpec((s_block, BD), lambda i: (i, 0)),   # x tile
            ],
            out_specs=pl.BlockSpec((s_block, BD), lambda i: (i, 0)),
        ),
        compiler_params=pltpu.CompilerParams(
            dimension_semantics=("parallel",),
            vmem_limit_bytes=vmem_limit,
        ),
    )(pe_seq, x2)
    return out.reshape(S, B, D)


def _reference(x, max_len=1024):
    # Pure-numpy reproduction of the PyTorch buffer + forward (batch_first=False).
    S, B, D = x.shape
    pe = np.zeros((max_len, D), dtype=np.float32)
    position = np.arange(0, max_len, dtype=np.float32)[:, None]
    div_term = np.exp(np.arange(0, D, 2, dtype=np.float32) * (-np.log(10000.0) / D))
    pe[:, 0::2] = np.sin(position * div_term)
    pe[:, 1::2] = np.cos(position * div_term)
    pe = pe[:, None, :]                     # (max_len, 1, D)
    out = np.array(x, dtype=np.float32)
    out[0::2] = out[0::2] + pe[: S // 2]
    out[1::2] = out[1::2] + pe[: S // 2]
    return out


if __name__ == "__main__":
    S, B, D = 8, 2, 32                      # seq=8, batch=2, d_model=32
    key = jax.random.PRNGKey(0)
    x = jax.random.normal(key, (S, B, D), dtype=jnp.float32)

    out = position_embedding_sine_bh(x, max_len=1024)
    out = jax.block_until_ready(out)

    ref = _reference(np.asarray(x))
    np.testing.assert_allclose(np.asarray(out), ref, rtol=1e-5, atol=1e-5)
    print("KERNEL_OK")
</pallas_src>

<mosaic_0001>
module attributes {stable_mosaic.version = 11 : i64} {
  func.func @_pe_add_kernel(%arg0: i32, %arg1: memref<8x32xf32, #tpu.memory_space<vmem>>, %arg2: memref<8x64xf32, #tpu.memory_space<vmem>>, %arg3: memref<8x64xf32, #tpu.memory_space<vmem>>) attributes {dimension_semantics = [#tpu.dimension_semantics<parallel>], iteration_bounds = array<i64: 1>, scalar_prefetch = 0 : i64, scratch_operands = 0 : i64, tpu.core_type = #tpu.core_type<tc>, window_params = [{transform_indices = @transform_0, window_bounds = array<i64: 8, 32>}, {transform_indices = @transform_1, window_bounds = array<i64: 8, 64>}, {transform_indices = @transform_2, window_bounds = array<i64: 8, 64>}]} {
    %c0 = arith.constant 0 : index
    %c0_0 = arith.constant 0 : index
    %0 = vector.load %arg1[%c0, %c0_0] : memref<8x32xf32, #tpu.memory_space<vmem>>, vector<8x32xf32>
    %1 = tpu.concatenate %0, %0 in 1 : vector<8x32xf32>, vector<8x32xf32> -> vector<8x64xf32>
    %c0_1 = arith.constant 0 : index
    %c0_2 = arith.constant 0 : index
    %2 = vector.load %arg2[%c0_1, %c0_2] : memref<8x64xf32, #tpu.memory_space<vmem>>, vector<8x64xf32>
    %3 = arith.addf %2, %1 : vector<8x64xf32>
    %c0_3 = arith.constant 0 : index
    %c0_4 = arith.constant 0 : index
    %4 = vector.load %arg3[%c0_3, %c0_4] : memref<8x64xf32, #tpu.memory_space<vmem>>, vector<8x64xf32>
    tpu.vector_store %arg3[%c0_3, %c0_4], %3 {strides = array<i32>} : memref<8x64xf32, #tpu.memory_space<vmem>>, vector<8x64xf32>,
    return
  }
  func.func @transform_0(%arg0: i32) -> (i32, i32) {
    %c0_i32 = arith.constant 0 : i32
    %c0_i32_0 = arith.constant 0 : i32
    return %arg0, %c0_i32 : i32, i32
  }
  func.func @transform_1(%arg0: i32) -> (i32, i32) {
    %c0_i32 = arith.constant 0 : i32
    %c0_i32_0 = arith.constant 0 : i32
    return %arg0, %c0_i32 : i32, i32
  }
  func.func @transform_2(%arg0: i32) -> (i32, i32) {
    %c0_i32 = arith.constant 0 : i32
    %c0_i32_0 = arith.constant 0 : i32
    return %arg0, %c0_i32 : i32, i32
  }
}

</mosaic_0001>

<llo_original>
// kernel: tpu_custom_call.1
$region0: #{tpu_custom_call.1}
  #allocation0 [shape = 'u32[]', space=smem, size = 0x4, offset = 0x4, fixed_abs, tag = 'smem constant byte address 0x4 - core index']
  #allocation1 [shape = 'u32[144,128]{1,0:T(1,128)}', space=vmem, size = 0x12000, scoped, tag = 'internal scratch']
  %s0 = inlined_call_operand.hbm [shape: f32[8,32], index: 0, kind: input, shape index: {}]
  %s1 = inlined_call_operand.hbm [shape: f32[8,64], index: 1, kind: input, shape index: {}]
  %s2 = inlined_call_operand.hbm [shape: f32[8,64], index: 2, kind: output, shape index: {}]
  %s3 = sld [smem:[#allocation0]]
  $region26: #{tpu_custom_call.1} parent=0
    _
  %s5 = ssub.s32 1, %s3
  %s6 = scalar_select 0, %s5, %s3
  $region1: #{tpu_custom_call.1} parent=0
    #allocation2 [shape = 'u8[4096]{0}', space=vmem, size = 0x1000, scoped, tag = 'input window, operand 0, single buffered']
    #allocation3 [shape = 's32[1]{0}', space=sflag, size = 0x4, scoped, tag = 'scoped memory for tpu_custom_call.1']
    #allocation4 [shape = 's32[1]{0}', space=sflag, size = 0x4, scoped, tag = 'scoped memory for tpu_custom_call.1']
    #allocation5 [shape = 'u8[4096]{0}', space=vmem, size = 0x1000, scoped, tag = 'input window, operand 1, single buffered']
    #allocation6 [shape = 's32[1]{0}', space=sflag, size = 0x4, scoped, tag = 'scoped memory for tpu_custom_call.1']
    #allocation7 [shape = 'u8[4096]{0}', space=vmem, size = 0x1000, scoped, tag = 'output window, operand 0, single buffered']
    %7 = vsyncpa [#allocation3], 0
    %8 = vsyncpa [#allocation6], 0
    %9 = vsyncpa [#allocation4], 0
    // Predicated region
    $region2: #{tpu_custom_call.1} parent=1 // pred_check
      _
    $region3: #{tpu_custom_call.1} parent=1 // pred_check_branch
      %11 = sbr.rel (0) target = $region5
    $region4: #{tpu_custom_call.1} parent=1 // pred_region
      %s13 = ssub.s32 128, 128
      %14 = vsyncadd [#allocation3], %s13
      %s16 = sshll.u32 [#allocation2], 4
      %s17 = int_to_ptr.vmem [resolvable:$true] %s16
      %19 = dma.hbm_to_vmem [thread:$0]  %s0, 128, %s17, [#allocation3]
    $region5: #{tpu_custom_call.1} parent=1 // pred_fallthru
      _
    // Predicated region
    $region6: #{tpu_custom_call.1} parent=1 // pred_check
      _
    $region7: #{tpu_custom_call.1} parent=1 // pred_check_branch
      %21 = sbr.rel (0) target = $region9
    $region8: #{tpu_custom_call.1} parent=1 // pred_region
      %s23 = ssub.s32 128, 128
      %24 = vsyncadd [#allocation6], %s23
      %s26 = sshll.u32 [#allocation5], 4
      %s27 = int_to_ptr.vmem [resolvable:$true] %s26
      %29 = dma.hbm_to_vmem [thread:$0]  %s1, 128, %s27, [#allocation6]
    $region9: #{tpu_custom_call.1} parent=1 // pred_fallthru
      _
    // Predicated region
    $region10: #{tpu_custom_call.1} parent=1 // pred_check
      _
    $region11: #{tpu_custom_call.1} parent=1 // pred_check_branch
      %31 = sbr.rel (0) target = $region13
    $region12: #{tpu_custom_call.1} parent=1 // pred_region
      %32 = dma.done [#allocation3], 128
    $region13: #{tpu_custom_call.1} parent=1 // pred_fallthru
      _
    // Predicated region
    $region14: #{tpu_custom_call.1} parent=1 // pred_check
      _
    $region15: #{tpu_custom_call.1} parent=1 // pred_check_branch
      %34 = sbr.rel (0) target = $region17
    $region16: #{tpu_custom_call.1} parent=1 // pred_region
      %35 = dma.done [#allocation6], 128
    $region17: #{tpu_custom_call.1} parent=1 // pred_fallthru
      _
    %v36 = vld [vmem:[#allocation2] sm:$0xff]
    %38 = vrot.lane.b32.xlu0 %v36, 32
    %v39 = vpop.permute.xlu0 %38
    %vm41 = vcmask 261120
    %v42 = vsel %vm41, %v36, %v39
    %v43 = vld [vmem:[#allocation5] sm:$0xff]
    %v44 = vadd.f32 %v43, %v42
    %vm45 = vcmask 523264
    %46 = vst.msk [vmem:[#allocation7] sm:$0xff] %vm45, %v44
    // Predicated region
    $region18: #{tpu_custom_call.1} parent=1 // pred_check
      _
    $region19: #{tpu_custom_call.1} parent=1 // pred_check_branch
      %48 = sbr.rel (0) target = $region21
    $region20: #{tpu_custom_call.1} parent=1 // pred_region
      %s50 = ssub.s32 128, 128
      %51 = vsyncadd [#allocation4], %s50
      %s53 = sshll.u32 [#allocation7], 4
      %s54 = int_to_ptr.vmem [resolvable:$true] %s53
      %56 = dma.vmem_to_hbm [thread:$0]  %s54, 128, %s2, [#allocation4]
    $region21: #{tpu_custom_call.1} parent=1 // pred_fallthru
      _
    // Predicated region
    $region22: #{tpu_custom_call.1} parent=1 // pred_check
      _
    $region23: #{tpu_custom_call.1} parent=1 // pred_check_branch
      %58 = sbr.rel (0) target = $region25
    $region24: #{tpu_custom_call.1} parent=1 // pred_region
      %59 = dma.done [#allocation4], 128
    $region25: #{tpu_custom_call.1} parent=1 // pred_fallthru
      _
    %60 = vsyncpa [#allocation3], 1
    %61 = vsyncpa [#allocation6], 1
    %62 = vsyncpa [#allocation4], 1

</llo_original>
